<compile_context>
chip_gen: v6e
topology: v6e:2x2x1
jax: 0.10.0
libtpu: 0.0.40
codegen_flags: <defaults>
</compile_context>

<pallas_src>
import math
import numpy as np

import jax
import jax.numpy as jnp
from jax import lax
from jax.experimental import pallas as pl
from jax.experimental.pallas import tpu as pltpu


# ----------------------------- configuration --------------------------------
BATCH       = 2
IN_CH       = 4
OUT_CH      = 8
RES         = 16                  # H == W == RES
W_DIM       = 32
KSIZE       = 3
USE_WSCALE  = True
WSCALE_GAIN = math.sqrt(2.0)
LR_MUL      = 1.0
NEG_SLOPE   = 0.2
EPS         = 1e-8

H = W = RES
P = H * W                         # flattened spatial size (lane axis)
LPAD = 128                        # lane-aligned left pad for the flat input


def _cpad(c_in):
    """Per-tap channel count rounded up to 8 (sublane-aligned slab rows)."""
    return ((c_in + 7) // 8) * 8


# ------------------------------- kernel -------------------------------------
def make_modulate_conv_kernel(batch, c_in, c_out, h, w, w_dim):
    """Builds the kernel body (all shape params are static python ints)."""
    assert KSIZE == 3, "flat-offset tap scheme assumes 3x3, stride 1"
    p = h * w
    inv_p = 1.0 / float(p)
    cpad = _cpad(c_in)
    kdim = KSIZE * KSIZE * cpad
    base = LPAD - (w + 1)          # tap t=(dy,dx) reads lanes [base+dy*w+dx, +p)

    def kernel(x_ref, wlat_ref, pk_ref, x_out_ref, style_out_ref,
               slab_ref, xpad_ref):
        # ---- unpack the packed parameter slab (sublane-aligned row blocks) --
        w_k   = pk_ref[0:c_out, 0:kdim]                 # [C_out, 9*cpad]
        wsty  = pk_ref[c_out:3 * c_out, 0:w_dim]        # [2*C_out, w_dim]
        bsty  = pk_ref[3 * c_out:5 * c_out, 0:1]        # [2*C_out, 1]
        bias  = pk_ref[5 * c_out:6 * c_out, 0:1]        # [C_out, 1]
        nstr  = pk_ref[6 * c_out:7 * c_out, 0:1]        # [C_out, 1]
        noise = pk_ref[7 * c_out:7 * c_out + 1, 0:p]    # [1, P]

        # ---- style affine for the whole batch: [2*C_out, B] -----------------
        style = jnp.dot(wsty, wlat_ref[...],
                        preferred_element_type=jnp.float32) + bsty
        style_out_ref[...] = style

        # ---- zero-padded flat input in VMEM (data at lane-aligned offset) ---
        xpad_ref[...] = jnp.zeros_like(xpad_ref)
        xpad_ref[:, :, pl.ds(LPAD, p)] = x_ref[...]      # 128-aligned store

        # Column-validity masks: taps reading column j-1 (dx=0) / j+1 (dx=2)
        # must not pick up the edge pixel of the neighbouring row.  Row
        # out-of-range taps read genuine zeros from the flat padding.
        col = lax.broadcasted_iota(jnp.int32, (1, p), 1) % w
        mask_l = (col >= 1).astype(jnp.float32)          # for dx == 0
        mask_r = (col <= w - 2).astype(jnp.float32)      # for dx == 2

        # ---- build the im2col tap slab [9*cpad, B*P] ------------------------
        slab_ref[...] = jnp.zeros_like(slab_ref)         # zero unused pad rows
        for t in range(KSIZE * KSIZE):
            dy, dx = divmod(t, KSIZE)
            off = base + dy * w + dx                     # static lane offset
            for b in range(batch):
                xs = xpad_ref[b, :, pl.ds(off, p)]       # [C_in, P]
                if dx == 0:
                    xs = xs * mask_l
                elif dx == KSIZE - 1:
                    xs = xs * mask_r
                slab_ref[t * cpad:t * cpad + c_in, b * p:(b + 1) * p] = xs

        # ---- ONE conv contraction for all 9 taps and all batch rows ---------
        acc = jnp.dot(w_k, slab_ref[...],
                      preferred_element_type=jnp.float32)   # [C_out, B*P]

        # per-channel noise + bias term (hoisted, batch-independent)
        extra = noise * nstr + bias                          # [C_out, P]

        for b in range(batch):
            # 128-aligned lane segment -> no statistics mixing across batch.
            seg = acc[:, b * p:(b + 1) * p] + extra
            seg = jnp.maximum(seg, NEG_SLOPE * seg)          # leaky relu
            # instance norm over the spatial (lane) axis
            mean = jnp.sum(seg, axis=1, keepdims=True) * inv_p
            xc = seg - mean
            var = jnp.sum(xc * xc, axis=1, keepdims=True) * inv_p
            xn = xc * lax.rsqrt(var + EPS)
            # style modulation: x * (gamma + 1) + beta
            gamma = style[:c_out, b:b + 1]                   # [C_out, 1]
            beta = style[c_out:, b:b + 1]                    # [C_out, 1]
            x_out_ref[b] = xn * (gamma + 1.0) + beta         # full-width store

    return kernel


# --------------------------- parameter packing -------------------------------
def prepare_params(params, c_in, c_out, h, w, w_dim):
    """Folds wscale/bscale/lr_mul into the parameters and packs everything the
    kernel needs into one lane/sublane-aligned slab (one DMA instead of ~8).
    Runs ONCE at module-init time."""
    p = h * w
    cpad = _cpad(c_in)
    kdim = KSIZE * KSIZE * cpad
    ncols = max(p, kdim, w_dim)
    nrows = 7 * c_out + 1

    w_eff = params['conv_weight'] * params['conv_wscale']          # [Co,Ci,3,3]
    # [Co, 3, 3, Ci] -> [Co, 9, Ci] -> pad Ci to cpad -> [Co, 9*cpad]
    w_k = jnp.transpose(w_eff, (0, 2, 3, 1)).reshape(c_out, KSIZE * KSIZE, c_in)
    w_k = jnp.pad(w_k, ((0, 0), (0, 0), (0, cpad - c_in))).reshape(c_out, kdim)

    wsty = params['style_weight'] * params['style_wscale']         # [2Co, wd]
    bsty = (params['style_bias'] * params['style_bscale']).reshape(2 * c_out, 1)
    bias = (params['conv_bias'] * params['conv_bscale']).reshape(c_out, 1)
    nstr = params['noise_strength'].reshape(c_out, 1)
    noise = params['noise'].reshape(p)

    pk = jnp.zeros((nrows, ncols), jnp.float32)
    pk = pk.at[0:c_out, 0:kdim].set(w_k)
    pk = pk.at[c_out:3 * c_out, 0:w_dim].set(wsty)
    pk = pk.at[3 * c_out:5 * c_out, 0:1].set(bsty)
    pk = pk.at[5 * c_out:6 * c_out, 0:1].set(bias)
    pk = pk.at[6 * c_out:7 * c_out, 0:1].set(nstr)
    pk = pk.at[7 * c_out, 0:p].set(noise)
    return pk


# ------------------------------- wrapper -------------------------------------
@jax.jit
def modulate_conv_forward(x, w_latent, pk):
    """Pallas forward of ModulateConvLayer (scale_factor=1, spatial noise,
    lrelu, use_style=True).  Returns (x_out, style) like the PyTorch module."""
    b, c_in, h, w = x.shape
    w_dim = w_latent.shape[1]
    c_out = (pk.shape[0] - 1) // 7
    p = h * w
    cpad = _cpad(c_in)

    x_flat = x.reshape(b, c_in, p)
    wlat_t = w_latent.T                                            # [w_dim, B]

    kernel = make_modulate_conv_kernel(b, c_in, c_out, h, w, w_dim)
    vmem = pl.BlockSpec(memory_space=pltpu.MemorySpace.VMEM)

    x_out, style_cols = pl.pallas_call(
        kernel,
        out_shape=(
            jax.ShapeDtypeStruct((b, c_out, p), jnp.float32),      # lane-dense
            jax.ShapeDtypeStruct((2 * c_out, b), jnp.float32),
        ),
        in_specs=[vmem, vmem, vmem],
        out_specs=(vmem, vmem),
        scratch_shapes=[
            pltpu.VMEM((KSIZE * KSIZE * cpad, b * p), jnp.float32),  # tap slab
            pltpu.VMEM((b, c_in, p + 2 * LPAD), jnp.float32),        # padded x
        ],
    )(x_flat, wlat_t, pk)

    return x_out.reshape(b, c_out, h, w), style_cols.T


# --------------------------- pure-JAX reference -------------------------------
def modulate_conv_reference(x, w_latent, params):
    hp = lax.Precision.HIGHEST
    c_out = params['conv_weight'].shape[0]
    w_eff = params['conv_weight'] * params['conv_wscale']
    y = lax.conv_general_dilated(
        x, w_eff, window_strides=(1, 1), padding=((1, 1), (1, 1)),
        dimension_numbers=('NCHW', 'OIHW', 'NCHW'), precision=hp)
    y = y + params['noise'] * params['noise_strength']
    y = y + (params['conv_bias'] * params['conv_bscale']).reshape(1, c_out, 1, 1)
    y = jnp.where(y >= 0.0, y, NEG_SLOPE * y)
    y = y - jnp.mean(y, axis=(2, 3), keepdims=True)
    y = y * lax.rsqrt(jnp.mean(y * y, axis=(2, 3), keepdims=True) + EPS)
    style = (jnp.dot(w_latent,
                     (params['style_weight'] * params['style_wscale']).T,
                     precision=hp)
             + params['style_bias'] * params['style_bscale'])
    gamma = style[:, :c_out, None, None]
    beta = style[:, c_out:, None, None]
    y = y * (gamma + 1.0) + beta
    return y, style


# --------------------------------- main ---------------------------------------
if __name__ == "__main__":
    key = jax.random.PRNGKey(0)
    ks = jax.random.split(key, 8)

    x = jax.random.normal(ks[0], (BATCH, IN_CH, RES, RES), dtype=jnp.float32)
    w_latent = jax.random.normal(ks[1], (BATCH, W_DIM), dtype=jnp.float32)

    fan_in = KSIZE * KSIZE * IN_CH
    conv_wscale = (WSCALE_GAIN / math.sqrt(fan_in)) * LR_MUL if USE_WSCALE else LR_MUL
    # Biases / noise_strength are zero at torch init; random values are used
    # here so the corresponding code paths are actually exercised by the test.
    params = {
        'conv_weight': jax.random.normal(ks[2], (OUT_CH, IN_CH, KSIZE, KSIZE),
                                         dtype=jnp.float32) / LR_MUL,
        'conv_wscale': conv_wscale,
        'conv_bias': 0.1 * jax.random.normal(ks[3], (OUT_CH,), dtype=jnp.float32),
        'conv_bscale': LR_MUL,
        'noise': jax.random.normal(ks[4], (1, 1, RES, RES), dtype=jnp.float32),
        'noise_strength': 0.1 * jax.random.normal(ks[5], (1, OUT_CH, 1, 1),
                                                  dtype=jnp.float32),
        'style_weight': jax.random.normal(ks[6], (2 * OUT_CH, W_DIM),
                                          dtype=jnp.float32),
        'style_wscale': 1.0 / math.sqrt(W_DIM),   # DenseLayer: gain=1, lr_mul=1
        'style_bias': 0.1 * jax.random.normal(ks[7], (2 * OUT_CH,),
                                              dtype=jnp.float32),
        'style_bscale': 1.0,
    }

    # Fold + pack parameters once ("module init"); steady state is one jitted
    # call with 3 DMA'd operands.
    pk = prepare_params(params, IN_CH, OUT_CH, H, W, W_DIM)
    jax.block_until_ready(pk)

    out_x, out_style = modulate_conv_forward(x, w_latent, pk)
    jax.block_until_ready(out_x)
    jax.block_until_ready(out_style)

    ref_x, ref_style = modulate_conv_reference(x, w_latent, params)
    np.testing.assert_allclose(np.asarray(out_style), np.asarray(ref_style),
                               rtol=1e-4, atol=1e-4)
    np.testing.assert_allclose(np.asarray(out_x), np.asarray(ref_x),
                               rtol=1e-4, atol=1e-4)

    print("KERNEL_OK")
</pallas_src>

<mosaic_0001>
module attributes {stable_mosaic.version = 11 : i64} {
  func.func @kernel(%arg0: memref<2x4x256xf32, #tpu.memory_space<vmem>>, %arg1: memref<32x2xf32, #tpu.memory_space<vmem>>, %arg2: memref<57x256xf32, #tpu.memory_space<vmem>>, %arg3: memref<2x8x256xf32, #tpu.memory_space<vmem>>, %arg4: memref<16x2xf32, #tpu.memory_space<vmem>>, %arg5: memref<72x512xf32, #tpu.memory_space<vmem>>, %arg6: memref<2x4x512xf32, #tpu.memory_space<vmem>>) attributes {dimension_semantics = [], scalar_prefetch = 0 : i64, scratch_operands = 2 : i64, tpu.core_type = #tpu.core_type<tc>} {
    %c0 = arith.constant 0 : index
    %c0_0 = arith.constant 0 : index
    %0 = vector.load %arg2[%c0, %c0_0] : memref<57x256xf32, #tpu.memory_space<vmem>>, vector<8x72xf32>
    %c8 = arith.constant 8 : index
    %c0_1 = arith.constant 0 : index
    %1 = vector.load %arg2[%c8, %c0_1] : memref<57x256xf32, #tpu.memory_space<vmem>>, vector<16x32xf32>
    %c24 = arith.constant 24 : index
    %c0_2 = arith.constant 0 : index
    %2 = vector.load %arg2[%c24, %c0_2] : memref<57x256xf32, #tpu.memory_space<vmem>>, vector<16x1xf32>
    %c40 = arith.constant 40 : index
    %c0_3 = arith.constant 0 : index
    %3 = vector.load %arg2[%c40, %c0_3] : memref<57x256xf32, #tpu.memory_space<vmem>>, vector<8x1xf32>
    %c48 = arith.constant 48 : index
    %c0_4 = arith.constant 0 : index
    %4 = vector.load %arg2[%c48, %c0_4] : memref<57x256xf32, #tpu.memory_space<vmem>>, vector<8x1xf32>
    %c56 = arith.constant 56 : index
    %c0_5 = arith.constant 0 : index
    %5 = vector.load %arg2[%c56, %c0_5] : memref<57x256xf32, #tpu.memory_space<vmem>>, vector<1x256xf32>
    %c0_6 = arith.constant 0 : index
    %c0_7 = arith.constant 0 : index
    %6 = vector.load %arg1[%c0_6, %c0_7] : memref<32x2xf32, #tpu.memory_space<vmem>>, vector<32x2xf32>
    %cst = arith.constant dense<0.000000e+00> : vector<16x2xf32>
    %7 = tpu.matmul %1, %6, %cst {dimension_numbers = #tpu.dot_dimension_numbers<[1], [0], [0], [1], [0, 0, 1, 1], [], []>} : vector<16x32xf32>, vector<32x2xf32>, vector<16x2xf32> -> vector<16x2xf32>
    %8 = vector.broadcast %2 : vector<16x1xf32> to vector<16x2xf32>
    %9 = arith.addf %7, %8 : vector<16x2xf32>
    %c0_8 = arith.constant 0 : index
    %c0_9 = arith.constant 0 : index
    %10 = vector.load %arg4[%c0_8, %c0_9] : memref<16x2xf32, #tpu.memory_space<vmem>>, vector<16x2xf32>
    tpu.vector_store %arg4[%c0_8, %c0_9], %9 {strides = array<i32>} : memref<16x2xf32, #tpu.memory_space<vmem>>, vector<16x2xf32>,
    %cst_10 = arith.constant 0.000000e+00 : f32
    %11 = vector.broadcast %cst_10 : f32 to vector<2x4x512xf32>
    %c0_11 = arith.constant 0 : index
    %c0_12 = arith.constant 0 : index
    %c0_13 = arith.constant 0 : index
    %12 = vector.load %arg6[%c0_11, %c0_12, %c0_13] : memref<2x4x512xf32, #tpu.memory_space<vmem>>, vector<2x4x512xf32>
    tpu.vector_store %arg6[%c0_11, %c0_12, %c0_13], %11 {strides = array<i32>} : memref<2x4x512xf32, #tpu.memory_space<vmem>>, vector<2x4x512xf32>,
    %c0_14 = arith.constant 0 : index
    %c0_15 = arith.constant 0 : index
    %c0_16 = arith.constant 0 : index
    %13 = vector.load %arg0[%c0_14, %c0_15, %c0_16] : memref<2x4x256xf32, #tpu.memory_space<vmem>>, vector<2x4x256xf32>
    %c0_17 = arith.constant 0 : index
    %c0_18 = arith.constant 0 : index
    %c128 = arith.constant 128 : index
    %14 = vector.load %arg6[%c0_17, %c0_18, %c128] : memref<2x4x512xf32, #tpu.memory_space<vmem>>, vector<2x4x256xf32>
    tpu.vector_store %arg6[%c0_17, %c0_18, %c128], %13 {strides = array<i32>} : memref<2x4x512xf32, #tpu.memory_space<vmem>>, vector<2x4x256xf32>,
    %15 = tpu.iota {dimensions = array<i32: 1>} : vector<1x256xi32>
    %c16_i32 = arith.constant 16 : i32
    %c0_i32 = arith.constant 0 : i32
    %16 = arith.cmpi eq, %c16_i32, %c0_i32 : i32
    %c1_i32 = arith.constant 1 : i32
    %17 = arith.select %16, %c1_i32, %c16_i32 : i32
    %18 = vector.broadcast %17 : i32 to vector<1x256xi32>
    %19 = arith.remsi %15, %18 : vector<1x256xi32>
    %c0_i32_19 = arith.constant 0 : i32
    %20 = vector.broadcast %c0_i32_19 : i32 to vector<1x256xi32>
    %21 = arith.cmpi ne, %19, %20 : vector<1x256xi32>
    %c0_i32_20 = arith.constant 0 : i32
    %22 = vector.broadcast %c0_i32_20 : i32 to vector<1x256xi32>
    %23 = arith.cmpi slt, %19, %22 : vector<1x256xi32>
    %c0_i32_21 = arith.constant 0 : i32
    %24 = arith.cmpi slt, %17, %c0_i32_21 : i32
    %25 = vector.broadcast %24 : i1 to vector<1x256xi1>
    %26 = vector.broadcast %25 : vector<1x256xi1> to vector<1x256xi1>
    %27 = arith.xori %23, %26 : vector<1x256xi1>
    %28 = arith.andi %27, %21 : vector<1x256xi1>
    %29 = vector.broadcast %17 : i32 to vector<1x256xi32>
    %30 = arith.addi %19, %29 : vector<1x256xi32>
    %31 = arith.select %28, %30, %19 : vector<1x256xi1>, vector<1x256xi32>
    %c1_i32_22 = arith.constant 1 : i32
    %32 = vector.broadcast %c1_i32_22 : i32 to vector<1x256xi32>
    %33 = arith.cmpi sge, %31, %32 : vector<1x256xi32>
    %34 = arith.extui %33 : vector<1x256xi1> to vector<1x256xi32>
    %35 = arith.sitofp %34 : vector<1x256xi32> to vector<1x256xf32>
    %c14_i32 = arith.constant 14 : i32
    %36 = vector.broadcast %c14_i32 : i32 to vector<1x256xi32>
    %37 = arith.cmpi sle, %31, %36 : vector<1x256xi32>
    %38 = arith.extui %37 : vector<1x256xi1> to vector<1x256xi32>
    %39 = arith.sitofp %38 : vector<1x256xi32> to vector<1x256xf32>
    %cst_23 = arith.constant 0.000000e+00 : f32
    %40 = vector.broadcast %cst_23 : f32 to vector<72x512xf32>
    %c0_24 = arith.constant 0 : index
    %c0_25 = arith.constant 0 : index
    %41 = vector.load %arg5[%c0_24, %c0_25] : memref<72x512xf32, #tpu.memory_space<vmem>>, vector<72x512xf32>
    tpu.vector_store %arg5[%c0_24, %c0_25], %40 {strides = array<i32>} : memref<72x512xf32, #tpu.memory_space<vmem>>, vector<72x512xf32>,
    %c0_26 = arith.constant 0 : index
    %c0_27 = arith.constant 0 : index
    %c111 = arith.constant 111 : index
    %42 = vector.load %arg6[%c0_26, %c0_27, %c111] : memref<2x4x512xf32, #tpu.memory_space<vmem>>, vector<1x4x256xf32>
    %43 = vector.shape_cast %42 : vector<1x4x256xf32> to vector<4x256xf32>
    %44 = vector.broadcast %35 : vector<1x256xf32> to vector<4x256xf32>
    %45 = arith.mulf %43, %44 : vector<4x256xf32>
    %c0_28 = arith.constant 0 : index
    %c0_29 = arith.constant 0 : index
    %46 = vector.load %arg5[%c0_28, %c0_29] : memref<72x512xf32, #tpu.memory_space<vmem>>, vector<4x256xf32>
    tpu.vector_store %arg5[%c0_28, %c0_29], %45 {strides = array<i32>} : memref<72x512xf32, #tpu.memory_space<vmem>>, vector<4x256xf32>,
    %c1 = arith.constant 1 : index
    %c0_30 = arith.constant 0 : index
    %c111_31 = arith.constant 111 : index
    %47 = vector.load %arg6[%c1, %c0_30, %c111_31] : memref<2x4x512xf32, #tpu.memory_space<vmem>>, vector<1x4x256xf32>
    %48 = vector.shape_cast %47 : vector<1x4x256xf32> to vector<4x256xf32>
    %49 = vector.broadcast %35 : vector<1x256xf32> to vector<4x256xf32>
    %50 = arith.mulf %48, %49 : vector<4x256xf32>
    %c0_32 = arith.constant 0 : index
    %c256 = arith.constant 256 : index
    %51 = vector.load %arg5[%c0_32, %c256] : memref<72x512xf32, #tpu.memory_space<vmem>>, vector<4x256xf32>
    tpu.vector_store %arg5[%c0_32, %c256], %50 {strides = array<i32>} : memref<72x512xf32, #tpu.memory_space<vmem>>, vector<4x256xf32>,
    %c0_33 = arith.constant 0 : index
    %c0_34 = arith.constant 0 : index
    %c112 = arith.constant 112 : index
    %52 = vector.load %arg6[%c0_33, %c0_34, %c112] : memref<2x4x512xf32, #tpu.memory_space<vmem>>, vector<1x4x256xf32>
    %53 = vector.shape_cast %52 : vector<1x4x256xf32> to vector<4x256xf32>
    %c8_35 = arith.constant 8 : index
    %c0_36 = arith.constant 0 : index
    %54 = vector.load %arg5[%c8_35, %c0_36] : memref<72x512xf32, #tpu.memory_space<vmem>>, vector<4x256xf32>
    tpu.vector_store %arg5[%c8_35, %c0_36], %53 {strides = array<i32>} : memref<72x512xf32, #tpu.memory_space<vmem>>, vector<4x256xf32>,
    %c1_37 = arith.constant 1 : index
    %c0_38 = arith.constant 0 : index
    %c112_39 = arith.constant 112 : index
    %55 = vector.load %arg6[%c1_37, %c0_38, %c112_39] : memref<2x4x512xf32, #tpu.memory_space<vmem>>, vector<1x4x256xf32>
    %56 = vector.shape_cast %55 : vector<1x4x256xf32> to vector<4x256xf32>
    %c8_40 = arith.constant 8 : index
    %c256_41 = arith.constant 256 : index
    %57 = vector.load %arg5[%c8_40, %c256_41] : memref<72x512xf32, #tpu.memory_space<vmem>>, vector<4x256xf32>
    tpu.vector_store %arg5[%c8_40, %c256_41], %56 {strides = array<i32>} : memref<72x512xf32, #tpu.memory_space<vmem>>, vector<4x256xf32>,
    %c0_42 = arith.constant 0 : index
    %c0_43 = arith.constant 0 : index
    %c113 = arith.constant 113 : index
    %58 = vector.load %arg6[%c0_42, %c0_43, %c113] : memref<2x4x512xf32, #tpu.memory_space<vmem>>, vector<1x4x256xf32>
    %59 = vector.shape_cast %58 : vector<1x4x256xf32> to vector<4x256xf32>
    %60 = vector.broadcast %39 : vector<1x256xf32> to vector<4x256xf32>
    %61 = arith.mulf %59, %60 : vector<4x256xf32>
    %c16 = arith.constant 16 : index
    %c0_44 = arith.constant 0 : index
    %62 = vector.load %arg5[%c16, %c0_44] : memref<72x512xf32, #tpu.memory_space<vmem>>, vector<4x256xf32>
    tpu.vector_store %arg5[%c16, %c0_44], %61 {strides = array<i32>} : memref<72x512xf32, #tpu.memory_space<vmem>>, vector<4x256xf32>,
    %c1_45 = arith.constant 1 : index
    %c0_46 = arith.constant 0 : index
    %c113_47 = arith.constant 113 : index
    %63 = vector.load %arg6[%c1_45, %c0_46, %c113_47] : memref<2x4x512xf32, #tpu.memory_space<vmem>>, vector<1x4x256xf32>
    %64 = vector.shape_cast %63 : vector<1x4x256xf32> to vector<4x256xf32>
    %65 = vector.broadcast %39 : vector<1x256xf32> to vector<4x256xf32>
    %66 = arith.mulf %64, %65 : vector<4x256xf32>
    %c16_48 = arith.constant 16 : index
    %c256_49 = arith.constant 256 : index
    %67 = vector.load %arg5[%c16_48, %c256_49] : memref<72x512xf32, #tpu.memory_space<vmem>>, vector<4x256xf32>
    tpu.vector_store %arg5[%c16_48, %c256_49], %66 {strides = array<i32>} : memref<72x512xf32, #tpu.memory_space<vmem>>, vector<4x256xf32>,
    %c0_50 = arith.constant 0 : index
    %c0_51 = arith.constant 0 : index
    %c127 = arith.constant 127 : index
    %68 = vector.load %arg6[%c0_50, %c0_51, %c127] : memref<2x4x512xf32, #tpu.memory_space<vmem>>, vector<1x4x256xf32>
    %69 = vector.shape_cast %68 : vector<1x4x256xf32> to vector<4x256xf32>
    %70 = vector.broadcast %35 : vector<1x256xf32> to vector<4x256xf32>
    %71 = arith.mulf %69, %70 : vector<4x256xf32>
    %c24_52 = arith.constant 24 : index
    %c0_53 = arith.constant 0 : index
    %72 = vector.load %arg5[%c24_52, %c0_53] : memref<72x512xf32, #tpu.memory_space<vmem>>, vector<4x256xf32>
    tpu.vector_store %arg5[%c24_52, %c0_53], %71 {strides = array<i32>} : memref<72x512xf32, #tpu.memory_space<vmem>>, vector<4x256xf32>,
    %c1_54 = arith.constant 1 : index
    %c0_55 = arith.constant 0 : index
    %c127_56 = arith.constant 127 : index
    %73 = vector.load %arg6[%c1_54, %c0_55, %c127_56] : memref<2x4x512xf32, #tpu.memory_space<vmem>>, vector<1x4x256xf32>
    %74 = vector.shape_cast %73 : vector<1x4x256xf32> to vector<4x256xf32>
    %75 = vector.broadcast %35 : vector<1x256xf32> to vector<4x256xf32>
    %76 = arith.mulf %74, %75 : vector<4x256xf32>
    %c24_57 = arith.constant 24 : index
    %c256_58 = arith.constant 256 : index
    %77 = vector.load %arg5[%c24_57, %c256_58] : memref<72x512xf32, #tpu.memory_space<vmem>>, vector<4x256xf32>
    tpu.vector_store %arg5[%c24_57, %c256_58], %76 {strides = array<i32>} : memref<72x512xf32, #tpu.memory_space<vmem>>, vector<4x256xf32>,
    %c0_59 = arith.constant 0 : index
    %c0_60 = arith.constant 0 : index
    %c128_61 = arith.constant 128 : index
    %78 = vector.load %arg6[%c0_59, %c0_60, %c128_61] : memref<2x4x512xf32, #tpu.memory_space<vmem>>, vector<1x4x256xf32>
    %79 = vector.shape_cast %78 : vector<1x4x256xf32> to vector<4x256xf32>
    %c32 = arith.constant 32 : index
    %c0_62 = arith.constant 0 : index
    %80 = vector.load %arg5[%c32, %c0_62] : memref<72x512xf32, #tpu.memory_space<vmem>>, vector<4x256xf32>
    tpu.vector_store %arg5[%c32, %c0_62], %79 {strides = array<i32>} : memref<72x512xf32, #tpu.memory_space<vmem>>, vector<4x256xf32>,
    %c1_63 = arith.constant 1 : index
    %c0_64 = arith.constant 0 : index
    %c128_65 = arith.constant 128 : index
    %81 = vector.load %arg6[%c1_63, %c0_64, %c128_65] : memref<2x4x512xf32, #tpu.memory_space<vmem>>, vector<1x4x256xf32>
    %82 = vector.shape_cast %81 : vector<1x4x256xf32> to vector<4x256xf32>
    %c32_66 = arith.constant 32 : index
    %c256_67 = arith.constant 256 : index
    %83 = vector.load %arg5[%c32_66, %c256_67] : memref<72x512xf32, #tpu.memory_space<vmem>>, vector<4x256xf32>
    tpu.vector_store %arg5[%c32_66, %c256_67], %82 {strides = array<i32>} : memref<72x512xf32, #tpu.memory_space<vmem>>, vector<4x256xf32>,
    %c0_68 = arith.constant 0 : index
    %c0_69 = arith.constant 0 : index
    %c129 = arith.constant 129 : index
    %84 = vector.load %arg6[%c0_68, %c0_69, %c129] : memref<2x4x512xf32, #tpu.memory_space<vmem>>, vector<1x4x256xf32>
    %85 = vector.shape_cast %84 : vector<1x4x256xf32> to vector<4x256xf32>
    %86 = vector.broadcast %39 : vector<1x256xf32> to vector<4x256xf32>
    %87 = arith.mulf %85, %86 : vector<4x256xf32>
    %c40_70 = arith.constant 40 : index
    %c0_71 = arith.constant 0 : index
    %88 = vector.load %arg5[%c40_70, %c0_71] : memref<72x512xf32, #tpu.memory_space<vmem>>, vector<4x256xf32>
    tpu.vector_store %arg5[%c40_70, %c0_71], %87 {strides = array<i32>} : memref<72x512xf32, #tpu.memory_space<vmem>>, vector<4x256xf32>,
    %c1_72 = arith.constant 1 : index
    %c0_73 = arith.constant 0 : index
    %c129_74 = arith.constant 129 : index
    %89 = vector.load %arg6[%c1_72, %c0_73, %c129_74] : memref<2x4x512xf32, #tpu.memory_space<vmem>>, vector<1x4x256xf32>
    %90 = vector.shape_cast %89 : vector<1x4x256xf32> to vector<4x256xf32>
    %91 = vector.broadcast %39 : vector<1x256xf32> to vector<4x256xf32>
    %92 = arith.mulf %90, %91 : vector<4x256xf32>
    %c40_75 = arith.constant 40 : index
    %c256_76 = arith.constant 256 : index
    %93 = vector.load %arg5[%c40_75, %c256_76] : memref<72x512xf32, #tpu.memory_space<vmem>>, vector<4x256xf32>
    tpu.vector_store %arg5[%c40_75, %c256_76], %92 {strides = array<i32>} : memref<72x512xf32, #tpu.memory_space<vmem>>, vector<4x256xf32>,
    %c0_77 = arith.constant 0 : index
    %c0_78 = arith.constant 0 : index
    %c143 = arith.constant 143 : index
    %94 = vector.load %arg6[%c0_77, %c0_78, %c143] : memref<2x4x512xf32, #tpu.memory_space<vmem>>, vector<1x4x256xf32>
    %95 = vector.shape_cast %94 : vector<1x4x256xf32> to vector<4x256xf32>
    %96 = vector.broadcast %35 : vector<1x256xf32> to vector<4x256xf32>
    %97 = arith.mulf %95, %96 : vector<4x256xf32>
    %c48_79 = arith.constant 48 : index
    %c0_80 = arith.constant 0 : index
    %98 = vector.load %arg5[%c48_79, %c0_80] : memref<72x512xf32, #tpu.memory_space<vmem>>, vector<4x256xf32>
    tpu.vector_store %arg5[%c48_79, %c0_80], %97 {strides = array<i32>} : memref<72x512xf32, #tpu.memory_space<vmem>>, vector<4x256xf32>,
    %c1_81 = arith.constant 1 : index
    %c0_82 = arith.constant 0 : index
    %c143_83 = arith.constant 143 : index
    %99 = vector.load %arg6[%c1_81, %c0_82, %c143_83] : memref<2x4x512xf32, #tpu.memory_space<vmem>>, vector<1x4x256xf32>
    %100 = vector.shape_cast %99 : vector<1x4x256xf32> to vector<4x256xf32>
    %101 = vector.broadcast %35 : vector<1x256xf32> to vector<4x256xf32>
    %102 = arith.mulf %100, %101 : vector<4x256xf32>
    %c48_84 = arith.constant 48 : index
    %c256_85 = arith.constant 256 : index
    %103 = vector.load %arg5[%c48_84, %c256_85] : memref<72x512xf32, #tpu.memory_space<vmem>>, vector<4x256xf32>
    tpu.vector_store %arg5[%c48_84, %c256_85], %102 {strides = array<i32>} : memref<72x512xf32, #tpu.memory_space<vmem>>, vector<4x256xf32>,
    %c0_86 = arith.constant 0 : index
    %c0_87 = arith.constant 0 : index
    %c144 = arith.constant 144 : index
    %104 = vector.load %arg6[%c0_86, %c0_87, %c144] : memref<2x4x512xf32, #tpu.memory_space<vmem>>, vector<1x4x256xf32>
    %105 = vector.shape_cast %104 : vector<1x4x256xf32> to vector<4x256xf32>
    %c56_88 = arith.constant 56 : index
    %c0_89 = arith.constant 0 : index
    %106 = vector.load %arg5[%c56_88, %c0_89] : memref<72x512xf32, #tpu.memory_space<vmem>>, vector<4x256xf32>
    tpu.vector_store %arg5[%c56_88, %c0_89], %105 {strides = array<i32>} : memref<72x512xf32, #tpu.memory_space<vmem>>, vector<4x256xf32>,
    %c1_90 = arith.constant 1 : index
    %c0_91 = arith.constant 0 : index
    %c144_92 = arith.constant 144 : index
    %107 = vector.load %arg6[%c1_90, %c0_91, %c144_92] : memref<2x4x512xf32, #tpu.memory_space<vmem>>, vector<1x4x256xf32>
    %108 = vector.shape_cast %107 : vector<1x4x256xf32> to vector<4x256xf32>
    %c56_93 = arith.constant 56 : index
    %c256_94 = arith.constant 256 : index
    %109 = vector.load %arg5[%c56_93, %c256_94] : memref<72x512xf32, #tpu.memory_space<vmem>>, vector<4x256xf32>
    tpu.vector_store %arg5[%c56_93, %c256_94], %108 {strides = array<i32>} : memref<72x512xf32, #tpu.memory_space<vmem>>, vector<4x256xf32>,
    %c0_95 = arith.constant 0 : index
    %c0_96 = arith.constant 0 : index
    %c145 = arith.constant 145 : index
    %110 = vector.load %arg6[%c0_95, %c0_96, %c145] : memref<2x4x512xf32, #tpu.memory_space<vmem>>, vector<1x4x256xf32>
    %111 = vector.shape_cast %110 : vector<1x4x256xf32> to vector<4x256xf32>
    %112 = vector.broadcast %39 : vector<1x256xf32> to vector<4x256xf32>
    %113 = arith.mulf %111, %112 : vector<4x256xf32>
    %c64 = arith.constant 64 : index
    %c0_97 = arith.constant 0 : index
    %114 = vector.load %arg5[%c64, %c0_97] : memref<72x512xf32, #tpu.memory_space<vmem>>, vector<4x256xf32>
    tpu.vector_store %arg5[%c64, %c0_97], %113 {strides = array<i32>} : memref<72x512xf32, #tpu.memory_space<vmem>>, vector<4x256xf32>,
    %c1_98 = arith.constant 1 : index
    %c0_99 = arith.constant 0 : index
    %c145_100 = arith.constant 145 : index
    %115 = vector.load %arg6[%c1_98, %c0_99, %c145_100] : memref<2x4x512xf32, #tpu.memory_space<vmem>>, vector<1x4x256xf32>
    %116 = vector.shape_cast %115 : vector<1x4x256xf32> to vector<4x256xf32>
    %117 = vector.broadcast %39 : vector<1x256xf32> to vector<4x256xf32>
    %118 = arith.mulf %116, %117 : vector<4x256xf32>
    %c64_101 = arith.constant 64 : index
    %c256_102 = arith.constant 256 : index
    %119 = vector.load %arg5[%c64_101, %c256_102] : memref<72x512xf32, #tpu.memory_space<vmem>>, vector<4x256xf32>
    tpu.vector_store %arg5[%c64_101, %c256_102], %118 {strides = array<i32>} : memref<72x512xf32, #tpu.memory_space<vmem>>, vector<4x256xf32>,
    %c0_103 = arith.constant 0 : index
    %c0_104 = arith.constant 0 : index
    %120 = vector.load %arg5[%c0_103, %c0_104] : memref<72x512xf32, #tpu.memory_space<vmem>>, vector<72x512xf32>
    %cst_105 = arith.constant dense<0.000000e+00> : vector<8x512xf32>
    %121 = tpu.matmul %0, %120, %cst_105 {dimension_numbers = #tpu.dot_dimension_numbers<[1], [0], [0], [1], [0, 0, 1, 1], [], []>} : vector<8x72xf32>, vector<72x512xf32>, vector<8x512xf32> -> vector<8x512xf32>
    %122 = vector.broadcast %5 : vector<1x256xf32> to vector<8x256xf32>
    %123 = vector.broadcast %4 : vector<8x1xf32> to vector<8x256xf32>
    %124 = arith.mulf %122, %123 : vector<8x256xf32>
    %125 = vector.broadcast %3 : vector<8x1xf32> to vector<8x256xf32>
    %126 = arith.addf %124, %125 : vector<8x256xf32>
    %127 = vector.extract_strided_slice %121 {offsets = [0, 0], sizes = [8, 256], strides = [1, 1]} : vector<8x512xf32> to vector<8x256xf32>
    %128 = arith.addf %127, %126 : vector<8x256xf32>
    %cst_106 = arith.constant 2.000000e-01 : f32
    %129 = vector.broadcast %cst_106 : f32 to vector<8x256xf32>
    %130 = arith.mulf %129, %128 : vector<8x256xf32>
    %131 = arith.maximumf %128, %130 : vector<8x256xf32>
    %cst_107 = arith.constant dense<0.000000e+00> : vector<8xf32>
    %132 = vector.multi_reduction <add>, %131, %cst_107 [1] : vector<8x256xf32> to vector<8xf32>
    %133 = vector.shape_cast %132 : vector<8xf32> to vector<8x1xf32>
    %cst_108 = arith.constant 3.906250e-03 : f32
    %134 = vector.broadcast %cst_108 : f32 to vector<8x1xf32>
    %135 = arith.mulf %133, %134 : vector<8x1xf32>
    %136 = vector.broadcast %135 : vector<8x1xf32> to vector<8x256xf32>
    %137 = arith.subf %131, %136 : vector<8x256xf32>
    %138 = arith.mulf %137, %137 : vector<8x256xf32>
    %cst_109 = arith.constant dense<0.000000e+00> : vector<8xf32>
    %139 = vector.multi_reduction <add>, %138, %cst_109 [1] : vector<8x256xf32> to vector<8xf32>
    %140 = vector.shape_cast %139 : vector<8xf32> to vector<8x1xf32>
    %cst_110 = arith.constant 3.906250e-03 : f32
    %141 = vector.broadcast %cst_110 : f32 to vector<8x1xf32>
    %142 = arith.mulf %140, %141 : vector<8x1xf32>
    %cst_111 = arith.constant 9.99999993E-9 : f32
    %143 = vector.broadcast %cst_111 : f32 to vector<8x1xf32>
    %144 = arith.addf %142, %143 : vector<8x1xf32>
    %145 = math.rsqrt %144 : vector<8x1xf32>
    %146 = vector.broadcast %145 : vector<8x1xf32> to vector<8x256xf32>
    %147 = arith.mulf %137, %146 : vector<8x256xf32>
    %148 = vector.extract_strided_slice %9 {offsets = [0, 0], sizes = [8, 1], strides = [1, 1]} : vector<16x2xf32> to vector<8x1xf32>
    %149 = vector.extract_strided_slice %9 {offsets = [8, 0], sizes = [8, 1], strides = [1, 1]} : vector<16x2xf32> to vector<8x1xf32>
    %cst_112 = arith.constant 1.000000e+00 : f32
    %150 = vector.broadcast %cst_112 : f32 to vector<8x1xf32>
    %151 = arith.addf %148, %150 : vector<8x1xf32>
    %152 = vector.broadcast %151 : vector<8x1xf32> to vector<8x256xf32>
    %153 = arith.mulf %147, %152 : vector<8x256xf32>
    %154 = vector.broadcast %149 : vector<8x1xf32> to vector<8x256xf32>
    %155 = arith.addf %153, %154 : vector<8x256xf32>
    %c0_113 = arith.constant 0 : index
    %c0_114 = arith.constant 0 : index
    %c0_115 = arith.constant 0 : index
    %156 = vector.load %arg3[%c0_113, %c0_114, %c0_115] : memref<2x8x256xf32, #tpu.memory_space<vmem>>, vector<1x8x256xf32>
    %157 = vector.shape_cast %156 : vector<1x8x256xf32> to vector<8x256xf32>
    %158 = vector.shape_cast %155 : vector<8x256xf32> to vector<1x8x256xf32>
    tpu.vector_store %arg3[%c0_113, %c0_114, %c0_115], %158 {strides = array<i32>} : memref<2x8x256xf32, #tpu.memory_space<vmem>>, vector<1x8x256xf32>,
    %159 = vector.extract_strided_slice %121 {offsets = [0, 256], sizes = [8, 256], strides = [1, 1]} : vector<8x512xf32> to vector<8x256xf32>
    %160 = arith.addf %159, %126 : vector<8x256xf32>
    %cst_116 = arith.constant 2.000000e-01 : f32
    %161 = vector.broadcast %cst_116 : f32 to vector<8x256xf32>
    %162 = arith.mulf %161, %160 : vector<8x256xf32>
    %163 = arith.maximumf %160, %162 : vector<8x256xf32>
    %cst_117 = arith.constant dense<0.000000e+00> : vector<8xf32>
    %164 = vector.multi_reduction <add>, %163, %cst_117 [1] : vector<8x256xf32> to vector<8xf32>
    %165 = vector.shape_cast %164 : vector<8xf32> to vector<8x1xf32>
    %cst_118 = arith.constant 3.906250e-03 : f32
    %166 = vector.broadcast %cst_118 : f32 to vector<8x1xf32>
    %167 = arith.mulf %165, %166 : vector<8x1xf32>
    %168 = vector.broadcast %167 : vector<8x1xf32> to vector<8x256xf32>
    %169 = arith.subf %163, %168 : vector<8x256xf32>
    %170 = arith.mulf %169, %169 : vector<8x256xf32>
    %cst_119 = arith.constant dense<0.000000e+00> : vector<8xf32>
    %171 = vector.multi_reduction <add>, %170, %cst_119 [1] : vector<8x256xf32> to vector<8xf32>
    %172 = vector.shape_cast %171 : vector<8xf32> to vector<8x1xf32>
    %cst_120 = arith.constant 3.906250e-03 : f32
    %173 = vector.broadcast %cst_120 : f32 to vector<8x1xf32>
    %174 = arith.mulf %172, %173 : vector<8x1xf32>
    %cst_121 = arith.constant 9.99999993E-9 : f32
    %175 = vector.broadcast %cst_121 : f32 to vector<8x1xf32>
    %176 = arith.addf %174, %175 : vector<8x1xf32>
    %177 = math.rsqrt %176 : vector<8x1xf32>
    %178 = vector.broadcast %177 : vector<8x1xf32> to vector<8x256xf32>
    %179 = arith.mulf %169, %178 : vector<8x256xf32>
    %180 = vector.extract_strided_slice %9 {offsets = [0, 1], sizes = [8, 1], strides = [1, 1]} : vector<16x2xf32> to vector<8x1xf32>
    %181 = vector.extract_strided_slice %9 {offsets = [8, 1], sizes = [8, 1], strides = [1, 1]} : vector<16x2xf32> to vector<8x1xf32>
    %cst_122 = arith.constant 1.000000e+00 : f32
    %182 = vector.broadcast %cst_122 : f32 to vector<8x1xf32>
    %183 = arith.addf %180, %182 : vector<8x1xf32>
    %184 = vector.broadcast %183 : vector<8x1xf32> to vector<8x256xf32>
    %185 = arith.mulf %179, %184 : vector<8x256xf32>
    %186 = vector.broadcast %181 : vector<8x1xf32> to vector<8x256xf32>
    %187 = arith.addf %185, %186 : vector<8x256xf32>
    %c1_123 = arith.constant 1 : index
    %c0_124 = arith.constant 0 : index
    %c0_125 = arith.constant 0 : index
    %188 = vector.load %arg3[%c1_123, %c0_124, %c0_125] : memref<2x8x256xf32, #tpu.memory_space<vmem>>, vector<1x8x256xf32>
    %189 = vector.shape_cast %188 : vector<1x8x256xf32> to vector<8x256xf32>
    %190 = vector.shape_cast %187 : vector<8x256xf32> to vector<1x8x256xf32>
    tpu.vector_store %arg3[%c1_123, %c0_124, %c0_125], %190 {strides = array<i32>} : memref<2x8x256xf32, #tpu.memory_space<vmem>>, vector<1x8x256xf32>,
    return
  }
}

</mosaic_0001>

<llo_original>
// kernel: modulate_conv_forward.1
$region0: #{modulate_conv_forward.1}
  #allocation0 [shape = 'u32[]', space=smem, size = 0x4, offset = 0x4, fixed_abs, tag = 'smem constant byte address 0x4 - core index']
  #allocation1 [shape = 'u32[144,128]{1,0:T(1,128)}', space=vmem, size = 0x12000, scoped, tag = 'internal scratch']
  #allocation2 [shape = 'f32[72,512]{1,0:T(8,128)}', space=vmem, size = 0x24000, scoped, tag = 'scratch operand']
  #allocation3 [shape = 'f32[2,4,512]{2,1,0:T(4,128)}', space=vmem, size = 0x4000, scoped, tag = 'scratch operand']
  %s0 = inlined_call_operand.vmem [shape: f32[2,4,256], index: 0, kind: input, shape index: {}]
  %s1 = inlined_call_operand.vmem [shape: f32[32,2], index: 1, kind: input, shape index: {}]
  %s2 = inlined_call_operand.vmem [shape: f32[57,256], index: 2, kind: input, shape index: {}]
  %s3 = inlined_call_operand.vmem [shape: f32[2,8,256], index: 3, kind: output, shape index: {0}]
  %s4 = inlined_call_operand.vmem [shape: f32[16,2], index: 4, kind: output, shape index: {1}]
  %5 = xla_tuple %s3, %s4
  %s6 = sld [smem:[#allocation0]]
  $region30: #{modulate_conv_forward.1} parent=0
    _
  %s8 = ssub.s32 1, %s6
  %s9 = scalar_select 0, %s8, %s6
  // Predicated region
  $region2: #{modulate_conv_forward.1} parent=0 // pred_check
    _
  $region3: #{modulate_conv_forward.1} parent=0 // pred_check_branch
    %11 = sbr.rel (0) target = $region5
  $region4: #{modulate_conv_forward.1} parent=0 // pred_region
    _
  $region5: #{modulate_conv_forward.1} parent=0 // pred_fallthru
    _
  // Predicated region
  $region6: #{modulate_conv_forward.1} parent=0 // pred_check
    _
  $region7: #{modulate_conv_forward.1} parent=0 // pred_check_branch
    %13 = sbr.rel (0) target = $region9
  $region8: #{modulate_conv_forward.1} parent=0 // pred_region
    _
  $region9: #{modulate_conv_forward.1} parent=0 // pred_fallthru
    _
  // Predicated region
  $region10: #{modulate_conv_forward.1} parent=0 // pred_check
    _
  $region11: #{modulate_conv_forward.1} parent=0 // pred_check_branch
    %15 = sbr.rel (0) target = $region13
  $region12: #{modulate_conv_forward.1} parent=0 // pred_region
    _
  $region13: #{modulate_conv_forward.1} parent=0 // pred_fallthru
    _
  %v16 = vld [vmem:[%s2] sm:$0xff]
  %v17 = vld [vmem:[%s2 + $0x10] sm:$0xff]
  %v18 = vld [vmem:[%s2 + $0x20] sm:$0xff]
  %v19 = vld [vmem:[%s2 + $0x30] sm:$0xff]
  %v20 = vld [vmem:[%s2 + $0x40] sm:$0xff]
  %v21 = vld [vmem:[%s2 + $0x50] sm:$0xff]
  %v22 = vld [vmem:[%s2 + $0x60] sm:$0xff]
  %s23 = scalar_lea.vmem %s2, 112
  %v24 = vld [vmem:[%s23] ss:$8 sm:$0x3]
  %v25 = vld [vmem:[%s1] sm:$0xff]
  %v26 = vld [vmem:[%s1 + $0x8] sm:$0xff]
  %v27 = vld [vmem:[%s1 + $0x10] sm:$0xff]
  %v28 = vld [vmem:[%s1 + $0x18] sm:$0xff]
  %30 = vset.pattern.permute.xlu0 0
  %31 = vperm.xlu0 %30, %v19
  %v32 = vpop.permute.xlu0 %31
  %35 = vset.pattern.permute.xlu0 0
  %36 = vperm.xlu0 %35, %v20
  %v37 = vpop.permute.xlu0 %36
  %vm39 = vcmask 261120
  %v41 = vsel %vm39, %v17, 0
  %v44 = vsel %vm39, %v18, 0
  %46 = vmatprep.subr.mxu0 0.0
  %47 = vmatpush1.msra.mxu0 0.0
  %48 = vmatprep.subr.mxu0 0.0
  %49 = vmatpush1.msra.mxu0 0.0
  %50 = vmatprep.subr.mxu0 0.0
  %51 = vmatpush1.msra.mxu0 0.0
  %52 = vmatprep.subr.mxu0 0.0
  %53 = vmatpush1.msra.mxu0 0.0
  %54 = vmatprep.subr.mxu0 0.0
  %55 = vmatpush1.msra.mxu0 0.0
  %56 = vmatprep.subr.mxu0 0.0
  %57 = vmatpush1.msra.mxu0 0.0
  %58 = vmatprep.subr.mxu0 0.0
  %59 = vmatpush1.msra.mxu0 0.0
  %60 = vmatprep.subr.mxu0 0.0
  %61 = vmatpush1.msra.mxu0 0.0
  %62 = vmatprep.subr.mxu0 0.0
  %63 = vmatpush1.msra.mxu0 0.0
  %64 = vmatprep.subr.mxu0 0.0
  %65 = vmatpush1.msra.mxu0 0.0
  %66 = vmatprep.subr.mxu0 0.0
  %67 = vmatpush1.msra.mxu0 0.0
  %68 = vmatprep.subr.mxu0 0.0
  %69 = vmatpush1.msra.mxu0 0.0
  %70 = vmatprep.subr.mxu0 0.0
  %71 = vmatpush1.msra.mxu0 %v28
  %72 = vmatprep.subr.mxu0 0.0
  %73 = vmatpush1.msra.mxu0 %v27
  %74 = vmatprep.subr.mxu0 0.0
  %75 = vmatpush1.msra.mxu0 %v26
  %76 = vmatprep.subr.mxu0 0.0
  %77 = vmatpush1.msra.mxu0 %v25
  %78 = vmatprep.subr.mxu0 0.0
  %79 = vmatpush2.msra.mxu0 0.0
  %80 = vmatprep.subr.mxu0 0.0
  %81 = vmatpush2.msra.mxu0 0.0
  %82 = vmatprep.subr.mxu0 0.0
  %83 = vmatpush2.msra.mxu0 0.0
  %84 = vmatprep.subr.mxu0 0.0
  %85 = vmatpush2.msra.mxu0 0.0
  %86 = vmatprep.subr.mxu0 0.0
  %87 = vmatpush2.msra.mxu0 0.0
  %88 = vmatprep.subr.mxu0 0.0
  %89 = vmatpush2.msra.mxu0 0.0
  %90 = vmatprep.subr.mxu0 0.0
  %91 = vmatpush2.msra.mxu0 0.0
  %92 = vmatprep.subr.mxu0 0.0
  %93 = vmatpush2.msra.mxu0 0.0
  %94 = vmatprep.subr.mxu0 0.0
  %95 = vmatpush2.msra.mxu0 0.0
  %96 = vmatprep.subr.mxu0 0.0
  %97 = vmatpush2.msra.mxu0 0.0
  %98 = vmatprep.subr.mxu0 0.0
  %99 = vmatpush2.msra.mxu0 0.0
  %100 = vmatprep.subr.mxu0 0.0
  %101 = vmatpush2.msra.mxu0 0.0
  %102 = vmatprep.subr.mxu0 0.0
  %103 = vmatpush2.msra.mxu0 0.0
  %104 = vmatprep.subr.mxu0 0.0
  %105 = vmatpush2.msra.mxu0 0.0
  %106 = vmatprep.subr.mxu0 0.0
  %107 = vmatpush2.msra.mxu0 0.0
  %108 = vmatprep.subr.mxu0 0.0
  %109 = vmatpush2.msra.mxu0 0.0
  %110 = vmatprep.mubr.f32.mxu0 0.0
  %111 = vmatmul.mubr.f32.gmra.mxu0 %v41
  %v112 = vpop.f32.mrf.mxu0
  %v113 = vadd.f32 %v32, %v112
  %v114 = vpop.f32.mrf.mxu0
  %115 = vmatprep.mubr.f32.mxu0 0.0
  %116 = vmatmul.mubr.f32.gmra.mxu0 %v44
  %v117 = vpop.f32.mrf.mxu0
  %v118 = vadd.f32 %v37, %v117
  %v119 = vpop.f32.mrf.mxu0
  %120 = vdwg.mxu0
  %vm121 = vcmask 15360
  %122 = vst.msk [vmem:[%s4] sm:$0xff] %vm121, %v113
  %123 = vst.msk [vmem:[%s4 + $0x8] sm:$0xff] %vm121, %v118
  %124 = vst [vmem:[#allocation3] sm:$0xff] 0.0
  %125 = vst [vmem:[#allocation3 + $0x8] sm:$0xff] 0.0
  %126 = vst [vmem:[#allocation3 + $0x10] sm:$0xff] 0.0
  %127 = vst [vmem:[#allocation3 + $0x18] sm:$0xff] 0.0
  %v128 = vld [vmem:[%s0] sm:$0xff]
  %v129 = vld [vmem:[%s0 + $0x8] sm:$0xff]
  %130 = vst [vmem:[#allocation3 + $0x4] sm:$0xff] %v128
  %131 = vst [vmem:[#allocation3 + $0x14] sm:$0xff] %v129
  %v132 = vlaneseq
  %v133 = vand.u32 %v132, 127
  %v134 = vadd.s32 %v133, 128
  %vm135 = vcmp.lt.s32.totalorder %v133, 0
  %v136 = vsub.s32 0, %v133
  %v137 = vsel %vm135, %v136, %v133
  %v138 = vshrl.u32 %v137, 4
  %v139 = vand.u32 %v137, 15
  %v140 = vsub.s32 0, %v139
  %v141 = vsel %vm135, %v140, %v139
  %vm142 = vcmp.lt.s32.totalorder %v134, 0
  %v143 = vsub.s32 0, %v134
  %v144 = vsel %vm142, %v143, %v134
  %v145 = vshrl.u32 %v144, 4
  %v146 = vand.u32 %v144, 15
  %v147 = vsub.s32 0, %v146
  %v148 = vsel %vm142, %v147, %v146
  %vm149 = vcmp.ne.s32.totalorder %v141, 0
  %vm150 = vcmp.ne.s32.totalorder %v148, 0
  %vm151 = vcmp.lt.s32.totalorder %v141, 0
  %vm152 = vcmp.lt.s32.totalorder %v148, 0
  %vm153 = vmand %vm151, %vm149
  %vm154 = vmand %vm152, %vm150
  %v155 = vadd.s32 %v141, 16
  %v156 = vadd.s32 %v148, 16
  %v157 = vsel %vm153, %v155, %v141
  %v158 = vsel %vm154, %v156, %v148
  %vm159 = vcmp.ge.s32.totalorder %v157, 1
  %vm160 = vcmp.ge.s32.totalorder %v158, 1
  %v161 = vsel %vm159, 1, 0
  %v162 = vsel %vm160, 1, 0
  %v163 = vcvt.s32.f32 %v161
  %v164 = vcvt.s32.f32 %v162
  %vm165 = vcmp.le.s32.totalorder %v157, 14
  %vm166 = vcmp.le.s32.totalorder %v158, 14
  %v167 = vsel %vm165, 1, 0
  %v168 = vsel %vm166, 1, 0
  %v169 = vcvt.s32.f32 %v167
  %v170 = vcvt.s32.f32 %v168
  %171 = vst [vmem:[#allocation2] sm:$0xff] 0.0
  %172 = vst [vmem:[#allocation2 + $0x8] sm:$0xff] 0.0
  %173 = vst [vmem:[#allocation2 + $0x10] sm:$0xff] 0.0
  %174 = vst [vmem:[#allocation2 + $0x18] sm:$0xff] 0.0
  %175 = vst [vmem:[#allocation2 + $0x20] sm:$0xff] 0.0
  %176 = vst [vmem:[#allocation2 + $0x28] sm:$0xff] 0.0
  %177 = vst [vmem:[#allocation2 + $0x30] sm:$0xff] 0.0
  %178 = vst [vmem:[#allocation2 + $0x38] sm:$0xff] 0.0
  %179 = vst [vmem:[#allocation2 + $0x40] sm:$0xff] 0.0
  %180 = vst [vmem:[#allocation2 + $0x48] sm:$0xff] 0.0
  %181 = vst [vmem:[#allocation2 + $0x50] sm:$0xff] 0.0
  %182 = vst [vmem:[#allocation2 + $0x58] sm:$0xff] 0.0
  %183 = vst [vmem:[#allocation2 + $0x60] sm:$0xff] 0.0
  %184 = vst [vmem:[#allocation2 + $0x68] sm:$0xff] 0.0
  %185 = vst [vmem:[#allocation2 + $0x70] sm:$0xff] 0.0
  %186 = vst [vmem:[#allocation2 + $0x78] sm:$0xff] 0.0
  %187 = vst [vmem:[#allocation2 + $0x80] sm:$0xff] 0.0
  %188 = vst [vmem:[#allocation2 + $0x88] sm:$0xff] 0.0
  %189 = vst [vmem:[#allocation2 + $0x90] sm:$0xff] 0.0
  %190 = vst [vmem:[#allocation2 + $0x98] sm:$0xff] 0.0
  %191 = vst [vmem:[#allocation2 + $0xa0] sm:$0xff] 0.0
  %192 = vst [vmem:[#allocation2 + $0xa8] sm:$0xff] 0.0
  %193 = vst [vmem:[#allocation2 + $0xb0] sm:$0xff] 0.0
  %194 = vst [vmem:[#allocation2 + $0xb8] sm:$0xff] 0.0
  %195 = vst [vmem:[#allocation2 + $0xc0] sm:$0xff] 0.0
  %196 = vst [vmem:[#allocation2 + $0xc8] sm:$0xff] 0.0
  %197 = vst [vmem:[#allocation2 + $0xd0] sm:$0xff] 0.0
  %198 = vst [vmem:[#allocation2 + $0xd8] sm:$0xff] 0.0
  %199 = vst [vmem:[#allocation2 + $0xe0] sm:$0xff] 0.0
  %200 = vst [vmem:[#allocation2 + $0xe8] sm:$0xff] 0.0
  %201 = vst [vmem:[#allocation2 + $0xf0] sm:$0xff] 0.0
  %202 = vst [vmem:[#allocation2 + $0xf8] sm:$0xff] 0.0
  %203 = vst [vmem:[#allocation2 + $0x100] sm:$0xff] 0.0
  %204 = vst [vmem:[#allocation2 + $0x108] sm:$0xff] 0.0
  %205 = vst [vmem:[#allocation2 + $0x110] sm:$0xff] 0.0
  %206 = vst [vmem:[#allocation2 + $0x118] sm:$0xff] 0.0
  %v207 = vld [vmem:[#allocation3] sm:$0xff]
  %v208 = vld [vmem:[#allocation3 + $0x8] sm:$0xf]
  %v211 = vcombine.low %v163, %v164
  %212 = vrot.lane.b32.xlu0 %v211, 111
  %v213 = vpop.permute.xlu0 %212
  %v214 = vrot.slane %v213, 4
  %vm215 = vcmask 908288
  %v216 = vsel %vm215, %v214, %v213
  %v219 = vmul.f32 %v207, %v216
  %v220 = vmul.f32 %v208, %v214
  %v223 = vcombine.high %v219, %v219
  %224 = vrot.lane.b32.xlu0 %v219, 17
  %v225 = vpop.permute.xlu0 %224
  %226 = vrot.lane.b32.xlu0 %v223, 17
  %v227 = vpop.permute.xlu0 %226
  %228 = vrot.lane.b32.xlu0 %v220, 17
  %v229 = vpop.permute.xlu0 %228
  %vm230 = vcmask 138240
  %v231 = vsel %vm230, %v225, %v227
  %v232 = vsel %vm230, %v227, %v229
  %235 = vst [vmem:[#allocation2] sm:$0xf] %v231
  %236 = vst [vmem:[#allocation2 + $0x8] sm:$0xf] %v232
  %s237 = scalar_lea.vmem [#allocation3], 16
  %v238 = vld [vmem:[%s237] sm:$0xff]
  %v239 = vld [vmem:[%s237 + $0x8] sm:$0xf]
  %v240 = vmul.f32 %v238, %v216
  %v241 = vmul.f32 %v239, %v214
  %v244 = vcombine.high %v240, %v240
  %245 = vrot.lane.b32.xlu0 %v240, 17
  %v246 = vpop.permute.xlu0 %245
  %247 = vrot.lane.b32.xlu0 %v244, 17
  %v248 = vpop.permute.xlu0 %247
  %249 = vrot.lane.b32.xlu0 %v241, 17
  %v250 = vpop.permute.xlu0 %249
  %v251 = vsel %vm230, %v246, %v248
  %v252 = vsel %vm230, %v248, %v250
  %255 = vst [vmem:[#allocation2 + $0x10] sm:$0xf] %v251
  %256 = vst [vmem:[#allocation2 + $0x18] sm:$0xf] %v252
  %v257 = vld [vmem:[#allocation3] sm:$0xff]
  %v258 = vld [vmem:[#allocation3 + $0x8] sm:$0xf]
  %v261 = vcombine.high %v257, %v257
  %262 = vrot.lane.b32.xlu0 %v257, 16
  %v263 = vpop.permute.xlu0 %262
  %264 = vrot.lane.b32.xlu0 %v261, 16
  %v265 = vpop.permute.xlu0 %264
  %266 = vrot.lane.b32.xlu0 %v258, 16
  %v267 = vpop.permute.xlu0 %266
  %vm268 = vcmask 130048
  %v269 = vsel %vm268, %v263, %v265
  %v270 = vsel %vm268, %v265, %v267
  %273 = vst [vmem:[#allocation2 + $0x20] sm:$0xf] %v269
  %274 = vst [vmem:[#allocation2 + $0x28] sm:$0xf] %v270
  %v275 = vld [vmem:[%s237] sm:$0xff]
  %v276 = vld [vmem:[%s237 + $0x8] sm:$0xf]
  %v279 = vcombine.high %v275, %v275
  %280 = vrot.lane.b32.xlu0 %v275, 16
  %v281 = vpop.permute.xlu0 %280
  %282 = vrot.lane.b32.xlu0 %v279, 16
  %v283 = vpop.permute.xlu0 %282
  %284 = vrot.lane.b32.xlu0 %v276, 16
  %v285 = vpop.permute.xlu0 %284
  %v286 = vsel %vm268, %v281, %v283
  %v287 = vsel %vm268, %v283, %v285
  %290 = vst [vmem:[#allocation2 + $0x30] sm:$0xf] %v286
  %291 = vst [vmem:[#allocation2 + $0x38] sm:$0xf] %v287
  %v292 = vld [vmem:[#allocation3] sm:$0xff]
  %v293 = vld [vmem:[#allocation3 + $0x8] sm:$0xf]
  %v296 = vcombine.low %v169, %v170
  %297 = vrot.lane.b32.xlu0 %v296, 113
  %v298 = vpop.permute.xlu0 %297
  %v299 = vrot.slane %v298, 4
  %vm300 = vcmask 924672
  %v301 = vsel %vm300, %v299, %v298
  %v304 = vmul.f32 %v292, %v301
  %v305 = vmul.f32 %v293, %v299
  %v308 = vcombine.high %v304, %v304
  %309 = vrot.lane.b32.xlu0 %v304, 15
  %v310 = vpop.permute.xlu0 %309
  %311 = vrot.lane.b32.xlu0 %v308, 15
  %v312 = vpop.permute.xlu0 %311
  %313 = vrot.lane.b32.xlu0 %v305, 15
  %v314 = vpop.permute.xlu0 %313
  %vm315 = vcmask 121856
  %v316 = vsel %vm315, %v310, %v312
  %v317 = vsel %vm315, %v312, %v314
  %320 = vst [vmem:[#allocation2 + $0x40] sm:$0xf] %v316
  %321 = vst [vmem:[#allocation2 + $0x48] sm:$0xf] %v317
  %v322 = vld [vmem:[%s237] sm:$0xff]
  %v323 = vld [vmem:[%s237 + $0x8] sm:$0xf]
  %v324 = vmul.f32 %v322, %v301
  %v325 = vmul.f32 %v323, %v299
  %v328 = vcombine.high %v324, %v324
  %329 = vrot.lane.b32.xlu0 %v324, 15
  %v330 = vpop.permute.xlu0 %329
  %331 = vrot.lane.b32.xlu0 %v328, 15
  %v332 = vpop.permute.xlu0 %331
  %333 = vrot.lane.b32.xlu0 %v325, 15
  %v334 = vpop.permute.xlu0 %333
  %v335 = vsel %vm315, %v330, %v332
  %v336 = vsel %vm315, %v332, %v334
  %339 = vst [vmem:[#allocation2 + $0x50] sm:$0xf] %v335
  %340 = vst [vmem:[#allocation2 + $0x58] sm:$0xf] %v336
  %v341 = vld [vmem:[#allocation3] sm:$0xff]
  %v342 = vld [vmem:[#allocation3 + $0x8] sm:$0xf]
  %343 = vrot.lane.b32.xlu0 %v211, 127
  %v344 = vpop.permute.xlu0 %343
  %v345 = vrot.slane %v344, 4
  %vm346 = vcmask 1039360
  %v347 = vsel %vm346, %v345, %v344
  %v350 = vmul.f32 %v341, %v347
  %v351 = vmul.f32 %v342, %v345
  %v354 = vcombine.high %v350, %v350
  %355 = vrot.lane.b32.xlu0 %v350, 1
  %v356 = vpop.permute.xlu0 %355
  %357 = vrot.lane.b32.xlu0 %v354, 1
  %v358 = vpop.permute.xlu0 %357
  %359 = vrot.lane.b32.xlu0 %v351, 1
  %v360 = vpop.permute.xlu0 %359
  %vm361 = vcmask 7168
  %v362 = vsel %vm361, %v356, %v358
  %v363 = vsel %vm361, %v358, %v360
  %366 = vst [vmem:[#allocation2 + $0x60] sm:$0xf] %v362
  %367 = vst [vmem:[#allocation2 + $0x68] sm:$0xf] %v363
  %v368 = vld [vmem:[%s237] sm:$0xff]
  %v369 = vld [vmem:[%s237 + $0x8] sm:$0xf]
  %v370 = vmul.f32 %v368, %v347
  %v371 = vmul.f32 %v369, %v345
  %v374 = vcombine.high %v370, %v370
  %375 = vrot.lane.b32.xlu0 %v370, 1
  %v376 = vpop.permute.xlu0 %375
  %377 = vrot.lane.b32.xlu0 %v374, 1
  %v378 = vpop.permute.xlu0 %377
  %379 = vrot.lane.b32.xlu0 %v371, 1
  %v380 = vpop.permute.xlu0 %379
  %v381 = vsel %vm361, %v376, %v378
  %v382 = vsel %vm361, %v378, %v380
  %385 = vst [vmem:[#allocation2 + $0x70] sm:$0xf] %v381
  %386 = vst [vmem:[#allocation2 + $0x78] sm:$0xf] %v382
  %v387 = vld [vmem:[#allocation3 + $0x4] sm:$0xff]
  %v389 = vcombine.high %v387, %v387
  %391 = vst [vmem:[#allocation2 + $0x80] sm:$0xf] %v387
  %392 = vst [vmem:[#allocation2 + $0x88] sm:$0xf] %v389
  %v393 = vld [vmem:[%s237 + $0x4] sm:$0xff]
  %v395 = vcombine.high %v393, %v393
  %397 = vst [vmem:[#allocation2 + $0x90] sm:$0xf] %v393
  %398 = vst [vmem:[#allocation2 + $0x98] sm:$0xf] %v395
  %v399 = vld [vmem:[#allocation3 + $0x4] sm:$0xff]
  %v400 = vld [vmem:[#allocation3 + $0xc] sm:$0xf]
  %401 = vrot.lane.b32.xlu0 %v296, 1
  %v402 = vpop.permute.xlu0 %401
  %v403 = vrot.slane %v402, 4
  %v404 = vsel %vm361, %v403, %v402
  %v407 = vmul.f32 %v399, %v404
  %v408 = vmul.f32 %v400, %v403
  %v411 = vcombine.high %v407, %v407
  %412 = vrot.lane.b32.xlu0 %v407, 127
  %v413 = vpop.permute.xlu0 %412
  %414 = vrot.lane.b32.xlu0 %v411, 127
  %v415 = vpop.permute.xlu0 %414
  %416 = vrot.lane.b32.xlu0 %v408, 127
  %v417 = vpop.permute.xlu0 %416
  %v418 = vsel %vm346, %v413, %v415
  %v419 = vsel %vm346, %v415, %v417
  %422 = vst [vmem:[#allocation2 + $0xa0] sm:$0xf] %v418
  %423 = vst [vmem:[#allocation2 + $0xa8] sm:$0xf] %v419
  %v424 = vld [vmem:[%s237 + $0x4] sm:$0xff]
  %v425 = vld [vmem:[%s237 + $0xc] sm:$0xf]
  %v426 = vmul.f32 %v424, %v404
  %v427 = vmul.f32 %v425, %v403
  %v430 = vcombine.high %v426, %v426
  %431 = vrot.lane.b32.xlu0 %v426, 127
  %v432 = vpop.permute.xlu0 %431
  %433 = vrot.lane.b32.xlu0 %v430, 127
  %v434 = vpop.permute.xlu0 %433
  %435 = vrot.lane.b32.xlu0 %v427, 127
  %v436 = vpop.permute.xlu0 %435
  %v437 = vsel %vm346, %v432, %v434
  %v438 = vsel %vm346, %v434, %v436
  %441 = vst [vmem:[#allocation2 + $0xb0] sm:$0xf] %v437
  %442 = vst [vmem:[#allocation2 + $0xb8] sm:$0xf] %v438
  %v443 = vld [vmem:[#allocation3 + $0x4] sm:$0xff]
  %v444 = vld [vmem:[#allocation3 + $0xc] sm:$0xf]
  %445 = vrot.lane.b32.xlu0 %v211, 15
  %v446 = vpop.permute.xlu0 %445
  %v447 = vrot.slane %v446, 4
  %v448 = vsel %vm315, %v447, %v446
  %v451 = vmul.f32 %v443, %v448
  %v452 = vmul.f32 %v444, %v447
  %v455 = vcombine.high %v451, %v451
  %456 = vrot.lane.b32.xlu0 %v451, 113
  %v457 = vpop.permute.xlu0 %456
  %458 = vrot.lane.b32.xlu0 %v455, 113
  %v459 = vpop.permute.xlu0 %458
  %460 = vrot.lane.b32.xlu0 %v452, 113
  %v461 = vpop.permute.xlu0 %460
  %v462 = vsel %vm300, %v457, %v459
  %v463 = vsel %vm300, %v459, %v461
  %466 = vst [vmem:[#allocation2 + $0xc0] sm:$0xf] %v462
  %467 = vst [vmem:[#allocation2 + $0xc8] sm:$0xf] %v463
  %v468 = vld [vmem:[%s237 + $0x4] sm:$0xff]
  %v469 = vld [vmem:[%s237 + $0xc] sm:$0xf]
  %v470 = vmul.f32 %v468, %v448
  %v471 = vmul.f32 %v469, %v447
  %v474 = vcombine.high %v470, %v470
  %475 = vrot.lane.b32.xlu0 %v470, 113
  %v476 = vpop.permute.xlu0 %475
  %477 = vrot.lane.b32.xlu0 %v474, 113
  %v478 = vpop.permute.xlu0 %477
  %479 = vrot.lane.b32.xlu0 %v471, 113
  %v480 = vpop.permute.xlu0 %479
  %v481 = vsel %vm300, %v476, %v478
  %v482 = vsel %vm300, %v478, %v480
  %485 = vst [vmem:[#allocation2 + $0xd0] sm:$0xf] %v481
  %486 = vst [vmem:[#allocation2 + $0xd8] sm:$0xf] %v482
  %v487 = vld [vmem:[#allocation3 + $0x4] sm:$0xff]
  %v488 = vld [vmem:[#allocation3 + $0xc] sm:$0xf]
  %v491 = vcombine.high %v487, %v487
  %492 = vrot.lane.b32.xlu0 %v487, 112
  %v493 = vpop.permute.xlu0 %492
  %494 = vrot.lane.b32.xlu0 %v491, 112
  %v495 = vpop.permute.xlu0 %494
  %496 = vrot.lane.b32.xlu0 %v488, 112
  %v497 = vpop.permute.xlu0 %496
  %vm498 = vcmask 916480
  %v499 = vsel %vm498, %v493, %v495
  %v500 = vsel %vm498, %v495, %v497
  %503 = vst [vmem:[#allocation2 + $0xe0] sm:$0xf] %v499
  %504 = vst [vmem:[#allocation2 + $0xe8] sm:$0xf] %v500
  %v505 = vld [vmem:[%s237 + $0x4] sm:$0xff]
  %v506 = vld [vmem:[%s237 + $0xc] sm:$0xf]
  %v509 = vcombine.high %v505, %v505
  %510 = vrot.lane.b32.xlu0 %v505, 112
  %v511 = vpop.permute.xlu0 %510
  %512 = vrot.lane.b32.xlu0 %v509, 112
  %v513 = vpop.permute.xlu0 %512
  %514 = vrot.lane.b32.xlu0 %v506, 112
  %v515 = vpop.permute.xlu0 %514
  %v516 = vsel %vm498, %v511, %v513
  %v517 = vsel %vm498, %v513, %v515
  %520 = vst [vmem:[#allocation2 + $0xf0] sm:$0xf] %v516
  %521 = vst [vmem:[#allocation2 + $0xf8] sm:$0xf] %v517
  %v522 = vld [vmem:[#allocation3 + $0x4] sm:$0xff]
  %v523 = vld [vmem:[#allocation3 + $0xc] sm:$0xf]
  %524 = vrot.lane.b32.xlu0 %v296, 17
  %v525 = vpop.permute.xlu0 %524
  %v526 = vrot.slane %v525, 4
  %v527 = vsel %vm230, %v526, %v525
  %v530 = vmul.f32 %v522, %v527
  %v531 = vmul.f32 %v523, %v526
  %v534 = vcombine.high %v530, %v530
  %535 = vrot.lane.b32.xlu0 %v530, 111
  %v536 = vpop.permute.xlu0 %535
  %537 = vrot.lane.b32.xlu0 %v534, 111
  %v538 = vpop.permute.xlu0 %537
  %539 = vrot.lane.b32.xlu0 %v531, 111
  %v540 = vpop.permute.xlu0 %539
  %v541 = vsel %vm215, %v536, %v538
  %v542 = vsel %vm215, %v538, %v540
  %545 = vst [vmem:[#allocation2 + $0x100] sm:$0xf] %v541
  %546 = vst [vmem:[#allocation2 + $0x108] sm:$0xf] %v542
  %v547 = vld [vmem:[%s237 + $0x4] sm:$0xff]
  %v548 = vld [vmem:[%s237 + $0xc] sm:$0xf]
  %v549 = vmul.f32 %v547, %v527
  %v550 = vmul.f32 %v548, %v526
  %v553 = vcombine.high %v549, %v549
  %554 = vrot.lane.b32.xlu0 %v549, 111
  %v555 = vpop.permute.xlu0 %554
  %556 = vrot.lane.b32.xlu0 %v553, 111
  %v557 = vpop.permute.xlu0 %556
  %558 = vrot.lane.b32.xlu0 %v550, 111
  %v559 = vpop.permute.xlu0 %558
  %v560 = vsel %vm215, %v555, %v557
  %v561 = vsel %vm215, %v557, %v559
  %564 = vst [vmem:[#allocation2 + $0x110] sm:$0xf] %v560
  %565 = vst [vmem:[#allocation2 + $0x118] sm:$0xf] %v561
  %v566 = vld [vmem:[#allocation2] sm:$0xff]
  %v567 = vld [vmem:[#allocation2 + $0x8] sm:$0xff]
  %v568 = vld [vmem:[#allocation2 + $0x10] sm:$0xff]
  %v569 = vld [vmem:[#allocation2 + $0x18] sm:$0xff]
  %v570 = vld [vmem:[#allocation2 + $0x20] sm:$0xff]
  %v571 = vld [vmem:[#allocation2 + $0x28] sm:$0xff]
  %v572 = vld [vmem:[#allocation2 + $0x30] sm:$0xff]
  %v573 = vld [vmem:[#allocation2 + $0x38] sm:$0xff]
  %v574 = vld [vmem:[#allocation2 + $0x40] sm:$0xff]
  %v575 = vld [vmem:[#allocation2 + $0x48] sm:$0xff]
  %v576 = vld [vmem:[#allocation2 + $0x50] sm:$0xff]
  %v577 = vld [vmem:[#allocation2 + $0x58] sm:$0xff]
  %v578 = vld [vmem:[#allocation2 + $0x60] sm:$0xff]
  %v579 = vld [vmem:[#allocation2 + $0x68] sm:$0xff]
  %v580 = vld [vmem:[#allocation2 + $0x70] sm:$0xff]
  %v581 = vld [vmem:[#allocation2 + $0x78] sm:$0xff]
  %v582 = vld [vmem:[#allocation2 + $0x80] sm:$0xff]
  %v583 = vld [vmem:[#allocation2 + $0x88] sm:$0xff]
  %v584 = vld [vmem:[#allocation2 + $0x90] sm:$0xff]
  %v585 = vld [vmem:[#allocation2 + $0x98] sm:$0xff]
  %v586 = vld [vmem:[#allocation2 + $0xa0] sm:$0xff]
  %v587 = vld [vmem:[#allocation2 + $0xa8] sm:$0xff]
  %v588 = vld [vmem:[#allocation2 + $0xb0] sm:$0xff]
  %v589 = vld [vmem:[#allocation2 + $0xb8] sm:$0xff]
  %v590 = vld [vmem:[#allocation2 + $0xc0] sm:$0xff]
  %v591 = vld [vmem:[#allocation2 + $0xc8] sm:$0xff]
  %v592 = vld [vmem:[#allocation2 + $0xd0] sm:$0xff]
  %v593 = vld [vmem:[#allocation2 + $0xd8] sm:$0xff]
  %v594 = vld [vmem:[#allocation2 + $0xe0] sm:$0xff]
  %v595 = vld [vmem:[#allocation2 + $0xe8] sm:$0xff]
  %v596 = vld [vmem:[#allocation2 + $0xf0] sm:$0xff]
  %v597 = vld [vmem:[#allocation2 + $0xf8] sm:$0xff]
  %v598 = vld [vmem:[#allocation2 + $0x100] sm:$0xff]
  %v599 = vld [vmem:[#allocation2 + $0x108] sm:$0xff]
  %v600 = vld [vmem:[#allocation2 + $0x110] sm:$0xff]
  %v601 = vld [vmem:[#allocation2 + $0x118] sm:$0xff]
  %vm602 = vcmask 588800
  %v604 = vsel %vm602, %v16, 0
  %606 = vmatprep.subr.mxu0 0.0
  %607 = vmatpush1.msra.mxu0 0.0
  %608 = vmatprep.subr.mxu0 0.0
  %609 = vmatpush1.msra.mxu0 0.0
  %610 = vmatprep.subr.mxu0 0.0
  %611 = vmatpush1.msra.mxu0 0.0
  %612 = vmatprep.subr.mxu0 0.0
  %613 = vmatpush1.msra.mxu0 0.0
  %614 = vmatprep.subr.mxu0 0.0
  %615 = vmatpush1.msra.mxu0 0.0
  %616 = vmatprep.subr.mxu0 0.0
  %617 = vmatpush1.msra.mxu0 0.0
  %618 = vmatprep.subr.mxu0 0.0
  %619 = vmatpush1.msra.mxu0 0.0
  %620 = vmatprep.subr.mxu0 %v599
  %621 = vmatpush1.msra.mxu0 %v598
  %622 = vmatprep.subr.mxu0 %v595
  %623 = vmatpush1.msra.mxu0 %v594
  %624 = vmatprep.subr.mxu0 %v591
  %625 = vmatpush1.msra.mxu0 %v590
  %626 = vmatprep.subr.mxu0 %v587
  %627 = vmatpush1.msra.mxu0 %v586
  %628 = vmatprep.subr.mxu0 %v583
  %629 = vmatpush1.msra.mxu0 %v582
  %630 = vmatprep.subr.mxu0 %v579
  %631 = vmatpush1.msra.mxu0 %v578
  %632 = vmatprep.subr.mxu0 %v575
  %633 = vmatpush1.msra.mxu0 %v574
  %634 = vmatprep.subr.mxu0 %v571
  %635 = vmatpush1.msra.mxu0 %v570
  %636 = vmatprep.subr.mxu0 %v567
  %637 = vmatpush1.msra.mxu0 %v566
  %638 = vmatprep.subr.mxu0 0.0
  %639 = vmatpush2.msra.mxu0 0.0
  %640 = vmatprep.subr.mxu0 0.0
  %641 = vmatpush2.msra.mxu0 0.0
  %642 = vmatprep.subr.mxu0 0.0
  %643 = vmatpush2.msra.mxu0 0.0
  %644 = vmatprep.subr.mxu0 0.0
  %645 = vmatpush2.msra.mxu0 0.0
  %646 = vmatprep.subr.mxu0 0.0
  %647 = vmatpush2.msra.mxu0 0.0
  %648 = vmatprep.subr.mxu0 0.0
  %649 = vmatpush2.msra.mxu0 0.0
  %650 = vmatprep.subr.mxu0 0.0
  %651 = vmatpush2.msra.mxu0 0.0
  %652 = vmatprep.subr.mxu0 0.0
  %653 = vmatpush2.msra.mxu0 0.0
  %654 = vmatprep.subr.mxu0 0.0
  %655 = vmatpush2.msra.mxu0 0.0
  %656 = vmatprep.subr.mxu0 0.0
  %657 = vmatpush2.msra.mxu0 0.0
  %658 = vmatprep.subr.mxu0 0.0
  %659 = vmatpush2.msra.mxu0 0.0
  %660 = vmatprep.subr.mxu0 0.0
  %661 = vmatpush2.msra.mxu0 0.0
  %662 = vmatprep.subr.mxu0 0.0
  %663 = vmatpush2.msra.mxu0 0.0
  %664 = vmatprep.subr.mxu0 0.0
  %665 = vmatpush2.msra.mxu0 0.0
  %666 = vmatprep.subr.mxu0 0.0
  %667 = vmatpush2.msra.mxu0 0.0
  %668 = vmatprep.subr.mxu0 0.0
  %669 = vmatpush2.msra.mxu0 0.0
  %670 = vmatprep.mubr.f32.mxu0 0.0
  %671 = vmatmul.mubr.f32.gmra.mxu0 %v604
  %v672 = vpop.f32.mrf.mxu0
  %v673 = vadd.f32 0.0, %v672
  %v674 = vpop.f32.mrf.mxu0
  %v675 = vadd.f32 0.0, %v674
  %676 = vdwg.mxu0
  %677 = vmatprep.subr.mxu0 0.0
  %678 = vmatpush1.msra.mxu0 0.0
  %679 = vmatprep.subr.mxu0 0.0
  %680 = vmatpush1.msra.mxu0 0.0
  %681 = vmatprep.subr.mxu0 0.0
  %682 = vmatpush1.msra.mxu0 0.0
  %683 = vmatprep.subr.mxu0 0.0
  %684 = vmatpush1.msra.mxu0 0.0
  %685 = vmatprep.subr.mxu0 0.0
  %686 = vmatpush1.msra.mxu0 0.0
  %687 = vmatprep.subr.mxu0 0.0
  %688 = vmatpush1.msra.mxu0 0.0
  %689 = vmatprep.subr.mxu0 0.0
  %690 = vmatpush1.msra.mxu0 0.0
  %691 = vmatprep.subr.mxu0 %v601
  %692 = vmatpush1.msra.mxu0 %v600
  %693 = vmatprep.subr.mxu0 %v597
  %694 = vmatpush1.msra.mxu0 %v596
  %695 = vmatprep.subr.mxu0 %v593
  %696 = vmatpush1.msra.mxu0 %v592
  %697 = vmatprep.subr.mxu0 %v589
  %698 = vmatpush1.msra.mxu0 %v588
  %699 = vmatprep.subr.mxu0 %v585
  %700 = vmatpush1.msra.mxu0 %v584
  %701 = vmatprep.subr.mxu0 %v581
  %702 = vmatpush1.msra.mxu0 %v580
  %703 = vmatprep.subr.mxu0 %v577
  %704 = vmatpush1.msra.mxu0 %v576
  %705 = vmatprep.subr.mxu0 %v573
  %706 = vmatpush1.msra.mxu0 %v572
  %707 = vmatprep.subr.mxu0 %v569
  %708 = vmatpush1.msra.mxu0 %v568
  %709 = vmatprep.subr.mxu0 0.0
  %710 = vmatpush2.msra.mxu0 0.0
  %711 = vmatprep.subr.mxu0 0.0
  %712 = vmatpush2.msra.mxu0 0.0
  %713 = vmatprep.subr.mxu0 0.0
  %714 = vmatpush2.msra.mxu0 0.0
  %715 = vmatprep.subr.mxu0 0.0
  %716 = vmatpush2.msra.mxu0 0.0
  %717 = vmatprep.subr.mxu0 0.0
  %718 = vmatpush2.msra.mxu0 0.0
  %719 = vmatprep.subr.mxu0 0.0
  %720 = vmatpush2.msra.mxu0 0.0
  %721 = vmatprep.subr.mxu0 0.0
  %722 = vmatpush2.msra.mxu0 0.0
  %723 = vmatprep.subr.mxu0 0.0
  %724 = vmatpush2.msra.mxu0 0.0
  %725 = vmatprep.subr.mxu0 0.0
  %726 = vmatpush2.msra.mxu0 0.0
  %727 = vmatprep.subr.mxu0 0.0
  %728 = vmatpush2.msra.mxu0 0.0
  %729 = vmatprep.subr.mxu0 0.0
  %730 = vmatpush2.msra.mxu0 0.0
  %731 = vmatprep.subr.mxu0 0.0
  %732 = vmatpush2.msra.mxu0 0.0
  %733 = vmatprep.subr.mxu0 0.0
  %734 = vmatpush2.msra.mxu0 0.0
  %735 = vmatprep.subr.mxu0 0.0
  %736 = vmatpush2.msra.mxu0 0.0
  %737 = vmatprep.subr.mxu0 0.0
  %738 = vmatpush2.msra.mxu0 0.0
  %739 = vmatprep.subr.mxu0 0.0
  %740 = vmatpush2.msra.mxu0 0.0
  %741 = vmatprep.mubr.f32.mxu0 0.0
  %742 = vmatmul.mubr.f32.gmra.mxu0 %v604
  %v743 = vpop.f32.mrf.mxu0
  %v744 = vadd.f32 0.0, %v743
  %v745 = vpop.f32.mrf.mxu0
  %v746 = vadd.f32 0.0, %v745
  %747 = vdwg.mxu0
  %v749 = vlaneseq
  %v750 = vshrl.u32 %v749, 7
  %v751 = vsub.s32 0, %v750
  %v752 = vrot.slane %v24, %v751
  %v753 = vlaneseq
  %v754 = vshrl.u32 %v753, 7
  %v755 = vsub.s32 1, %v754
  %v756 = vrot.slane %v24, %v755
  %760 = vset.pattern.permute.xlu0 0
  %761 = vperm.xlu0 %760, %v22
  %v762 = vpop.permute.xlu0 %761
  %v764 = vmul.f32 %v752, %v762
  %v765 = vmul.f32 %v756, %v762
  %767 = vset.pattern.permute.xlu0 0
  %768 = vperm.xlu0 %767, %v21
  %v769 = vpop.permute.xlu0 %768
  %v771 = vadd.f32 %v764, %v769
  %v772 = vadd.f32 %v765, %v769
  %v773 = vadd.f32 %v673, %v771
  %v774 = vadd.f32 %v675, %v772
  %v775 = vmul.f32 %v773, 0.2
  %v776 = vmul.f32 %v774, 0.2
  %v777 = vmax.f32 %v773, %v775
  %v778 = vmax.f32 %v774, %v776
  %v779 = vadd.f32 %v777, %v778
  %780 = vadd.xlane.f32.xlu0 %v779
  %v781 = vpop.xlane.xlu0 %780
  %v782 = vmul.f32 %v781, 0.00390625
  %v783 = vsub.f32 %v777, %v782
  %v784 = vsub.f32 %v778, %v782
  %v785 = vmul.f32 %v783, %v783
  %v786 = vmul.f32 %v784, %v784
  %v787 = vadd.f32 %v785, %v786
  %788 = vadd.xlane.f32.xlu0 %v787
  %v789 = vpop.xlane.xlu0 %788
  %v790 = vmul.f32 %v789, 0.00390625
  %v791 = vadd.f32 %v790, 1e-08
  %v792 = vrsqrt.pop %v791
  %v793 = vmul.f32 %v783, %v792
  %v794 = vmul.f32 %v784, %v792
  %v795 = vadd.f32 %v113, 1.0
  %797 = vset.pattern.permute.xlu0 0
  %798 = vperm.xlu0 %797, %v795
  %v799 = vpop.permute.xlu0 %798
  %v801 = vmul.f32 %v793, %v799
  %v802 = vmul.f32 %v794, %v799
  %804 = vset.pattern.permute.xlu0 0
  %805 = vperm.xlu0 %804, %v118
  %v806 = vpop.permute.xlu0 %805
  %v808 = vadd.f32 %v801, %v806
  %v809 = vadd.f32 %v802, %v806
  %810 = vst [vmem:[%s3] sm:$0xff] %v808
  %811 = vst [vmem:[%s3 + $0x8] sm:$0xff] %v809
  %v812 = vadd.f32 %v744, %v771
  %v813 = vadd.f32 %v746, %v772
  %v814 = vmul.f32 %v812, 0.2
  %v815 = vmul.f32 %v813, 0.2
  %v816 = vmax.f32 %v812, %v814
  %v817 = vmax.f32 %v813, %v815
  %v818 = vadd.f32 %v816, %v817
  %819 = vadd.xlane.f32.xlu0 %v818
  %v820 = vpop.xlane.xlu0 %819
  %v821 = vmul.f32 %v820, 0.00390625
  %v822 = vsub.f32 %v816, %v821
  %v823 = vsub.f32 %v817, %v821
  %v824 = vmul.f32 %v822, %v822
  %v825 = vmul.f32 %v823, %v823
  %v826 = vadd.f32 %v824, %v825
  %827 = vadd.xlane.f32.xlu0 %v826
  %v828 = vpop.xlane.xlu0 %827
  %v829 = vmul.f32 %v828, 0.00390625
  %v830 = vadd.f32 %v829, 1e-08
  %v831 = vrsqrt.pop %v830
  %v832 = vmul.f32 %v822, %v831
  %v833 = vmul.f32 %v823, %v831
  %834 = vset.pattern.permute.xlu0 1
  %835 = vperm.xlu0 %834, %v795
  %v836 = vpop.permute.xlu0 %835
  %v838 = vmul.f32 %v832, %v836
  %v839 = vmul.f32 %v833, %v836
  %840 = vset.pattern.permute.xlu0 1
  %841 = vperm.xlu0 %840, %v118
  %v842 = vpop.permute.xlu0 %841
  %v844 = vadd.f32 %v838, %v842
  %v845 = vadd.f32 %v839, %v842
  %s846 = scalar_lea.vmem %s3, 16
  %847 = vst [vmem:[%s846] sm:$0xff] %v844
  %848 = vst [vmem:[%s846 + $0x8] sm:$0xff] %v845
  // Predicated region
  $region14: #{modulate_conv_forward.1} parent=0 // pred_check
    _
  $region15: #{modulate_conv_forward.1} parent=0 // pred_check_branch
    %850 = sbr.rel (0) target = $region17
  $region16: #{modulate_conv_forward.1} parent=0 // pred_region
    _
  $region17: #{modulate_conv_forward.1} parent=0 // pred_fallthru
    _
  // Predicated region
  $region18: #{modulate_conv_forward.1} parent=0 // pred_check
    _
  $region19: #{modulate_conv_forward.1} parent=0 // pred_check_branch
    %852 = sbr.rel (0) target = $region21
  $region20: #{modulate_conv_forward.1} parent=0 // pred_region
    _
  $region21: #{modulate_conv_forward.1} parent=0 // pred_fallthru
    _
  // Predicated region
  $region22: #{modulate_conv_forward.1} parent=0 // pred_check
    _
  $region23: #{modulate_conv_forward.1} parent=0 // pred_check_branch
    %854 = sbr.rel (0) target = $region25
  $region24: #{modulate_conv_forward.1} parent=0 // pred_region
    _
  $region25: #{modulate_conv_forward.1} parent=0 // pred_fallthru
    _
  // Predicated region
  $region26: #{modulate_conv_forward.1} parent=0 // pred_check
    _
  $region27: #{modulate_conv_forward.1} parent=0 // pred_check_branch
    %856 = sbr.rel (0) target = $region29
  $region28: #{modulate_conv_forward.1} parent=0 // pred_region
    _
  $region29: #{modulate_conv_forward.1} parent=0 // pred_fallthru
    _

</llo_original>
